<compile_context>
chip_gen: v6e
topology: v6e:2x2x1
jax: 0.10.0
libtpu: 0.0.40
codegen_flags: <defaults>
</compile_context>

<pallas_src>
import functools

import jax
import jax.numpy as jnp
from jax.experimental import pallas as pl
from jax.experimental.pallas import tpu as pltpu

LANE = 128  # classifier output columns padded to one full lane width


def classifier_kernel(a_ref, h_ref, w1_ref, b1_ref, w2_ref, b2_ref,
                      wc_ref, bc_ref, out_ref):
    """One grid step = G graphs processed as block-diagonal GEMMs.

    a_ref : (G*N, G*N)  bf16  block-diagonal normalized adjacency (dst, src)
    h_ref : (G*N, F)    bf16  node features (graph-major rows)
    out_ref: (G, LANE)  f32   padded class logits
    """
    GN = a_ref.shape[0]
    G = out_ref.shape[0]
    N = GN // G
    hidden = w1_ref.shape[1]

    a = a_ref[...]                                               # (GN, GN) bf16

    # ---- GraphConv 1: relu(A_hat @ (h @ W1) + b1) ----
    hw1 = jnp.dot(h_ref[...], w1_ref[...],
                  preferred_element_type=jnp.float32)            # (GN, hidden) f32
    msg1 = jnp.dot(a, hw1.astype(jnp.bfloat16),
                   preferred_element_type=jnp.float32)           # (GN, hidden) f32
    h1 = jnp.maximum(msg1 + b1_ref[...], 0.0)

    # ---- GraphConv 2: relu(A_hat @ (h1 @ W2) + b2) ----
    hw2 = jnp.dot(h1.astype(jnp.bfloat16), w2_ref[...],
                  preferred_element_type=jnp.float32)            # (GN, hidden) f32
    msg2 = jnp.dot(a, hw2.astype(jnp.bfloat16),
                   preferred_element_type=jnp.float32)           # (GN, hidden) f32
    h2 = jnp.maximum(msg2 + b2_ref[...], 0.0)

    # ---- dgl.max_nodes readout: max over the N nodes of each graph ----
    hg = jnp.max(h2.reshape(G, N, hidden), axis=1)               # (G, hidden) f32

    # ---- classify: Linear(hidden, n_classes) padded to LANE columns ----
    out_ref[...] = (jnp.dot(hg.astype(jnp.bfloat16), wc_ref[...],
                            preferred_element_type=jnp.float32)
                    + bc_ref[...])                               # (G, LANE) f32


def normalize_adjacency(adj):
    """adj[b, src, dst] (0/1). Returns A_hat[b, dst, src] with 'both' norm,
    degrees clamped to >= 1 (DGL GraphConv / allow_zero_in_degree semantics)."""
    adj = adj.astype(jnp.float32)
    out_deg = jnp.clip(adj.sum(axis=2), 1.0, None)   # (B, N) out-degree of src
    in_deg = jnp.clip(adj.sum(axis=1), 1.0, None)    # (B, N) in-degree of dst
    a = adj * (out_deg ** -0.5)[:, :, None] * (in_deg ** -0.5)[:, None, :]
    return jnp.transpose(a, (0, 2, 1))               # (B, dst, src)


@functools.partial(jax.jit, static_argnames=("graphs_per_block",))
def classifier_forward(adj, h, params, graphs_per_block=None):
    """adj: [B, N, N] raw 0/1 adjacency (src, dst); h: [B, N, in_dim].

    graphs_per_block=None -> one grid step with all B graphs (best on 1-TC
    v5e/v6e); pass B//2 to shard across the two v7x TensorCores.
    """
    B, N, _ = adj.shape
    in_dim = h.shape[-1]
    hidden = params["w1"].shape[1]
    n_classes = params["wc"].shape[1]

    G = B if graphs_per_block is None else graphs_per_block
    assert B % G == 0, "batch must be divisible by graphs_per_block"
    assert G == B or G % 8 == 0, "graphs_per_block must be B or a multiple of 8"
    grid = B // G
    GN = G * N

    # --- preprocessing fused into this jit with the kernel call ---
    a_norm = normalize_adjacency(adj)                            # (B, dst, src) f32
    a4 = a_norm.reshape(grid, G, N, N).astype(jnp.bfloat16)
    eye = jnp.eye(G, dtype=jnp.bfloat16)
    # Block-diagonal per grid step: row = g*N + dst, col = h*N + src.
    a_blk = jnp.einsum('rgde,gh->rgdhe', a4, eye).reshape(grid * GN, GN)

    h_flat = h.reshape(B * N, in_dim).astype(jnp.bfloat16)
    w1 = params["w1"].astype(jnp.bfloat16)
    w2 = params["w2"].astype(jnp.bfloat16)
    b1 = params["b1"].reshape(1, hidden).astype(jnp.float32)
    b2 = params["b2"].reshape(1, hidden).astype(jnp.float32)
    wc = jnp.zeros((hidden, LANE), jnp.bfloat16).at[:, :n_classes].set(
        params["wc"].astype(jnp.bfloat16))
    bc = jnp.zeros((1, LANE), jnp.float32).at[:, :n_classes].set(
        params["bc"].reshape(1, n_classes).astype(jnp.float32))

    out = pl.pallas_call(
        classifier_kernel,
        out_shape=jax.ShapeDtypeStruct((B, LANE), jnp.float32),
        grid_spec=pl.GridSpec(
            grid=(grid,),
            in_specs=[
                pl.BlockSpec((GN, GN), lambda b: (b, 0)),          # A_blk (bf16)
                pl.BlockSpec((GN, in_dim), lambda b: (b, 0)),      # node features
                pl.BlockSpec((in_dim, hidden), lambda b: (0, 0)),  # W1
                pl.BlockSpec((1, hidden), lambda b: (0, 0)),       # b1
                pl.BlockSpec((hidden, hidden), lambda b: (0, 0)),  # W2
                pl.BlockSpec((1, hidden), lambda b: (0, 0)),       # b2
                pl.BlockSpec((hidden, LANE), lambda b: (0, 0)),    # Wc (padded)
                pl.BlockSpec((1, LANE), lambda b: (0, 0)),         # bc (padded)
            ],
            out_specs=pl.BlockSpec((G, LANE), lambda b: (b, 0)),
        ),
        compiler_params=pltpu.CompilerParams(
            dimension_semantics=("parallel",)),
    )(a_blk, h_flat, w1, b1, w2, b2, wc, bc)

    return out[:, :n_classes]                                     # (B, n_classes)


def reference_forward(adj, h, params):
    """Pure-JAX (f32) reference of the module forward, for a sanity check."""
    a = normalize_adjacency(adj)
    h1 = jnp.maximum(
        jnp.einsum('bds,bsf->bdf', a, h @ params["w1"]) + params["b1"], 0.0)
    h2 = jnp.maximum(
        jnp.einsum('bds,bsf->bdf', a, h1 @ params["w2"]) + params["b2"], 0.0)
    hg = h2.max(axis=1)
    return hg @ params["wc"] + params["bc"]


if __name__ == "__main__":
    B, N = 16, 16               # 16 graphs, 16 nodes each
    in_dim, hidden_dim, n_classes = 8, 32, 4

    key = jax.random.PRNGKey(0)
    k_adj, k_feat, k_w1, k_b1, k_w2, k_b2, k_wc, k_bc = jax.random.split(key, 8)

    # Deterministic synthetic graphs (dense 0/1 adjacency, ~30% edges) + features.
    adj = (jax.random.uniform(k_adj, (B, N, N)) < 0.3).astype(jnp.float32)
    h = jax.random.normal(k_feat, (B, N, in_dim), dtype=jnp.float32)

    params = {
        "w1": jax.random.normal(k_w1, (in_dim, hidden_dim), jnp.float32) * 0.1,
        "b1": jax.random.normal(k_b1, (1, hidden_dim), jnp.float32) * 0.1,
        "w2": jax.random.normal(k_w2, (hidden_dim, hidden_dim), jnp.float32) * 0.1,
        "b2": jax.random.normal(k_b2, (1, hidden_dim), jnp.float32) * 0.1,
        "wc": jax.random.normal(k_wc, (hidden_dim, n_classes), jnp.float32) * 0.1,
        "bc": jax.random.normal(k_bc, (1, n_classes), jnp.float32) * 0.1,
    }

    ref = reference_forward(adj, h, params)

    # Default: single grid step (recommended on single-TC v5e/v6e).
    logits = classifier_forward(adj, h, params)
    jax.block_until_ready(logits)
    assert logits.shape == (B, n_classes)
    err1 = float(jnp.max(jnp.abs(logits - ref)))
    assert jnp.allclose(logits, ref, rtol=5e-2, atol=5e-2), f"max abs err {err1}"

    # v7x-style 2-step variant (grid=(2,), one step per TensorCore) also works.
    logits2 = classifier_forward(adj, h, params, graphs_per_block=B // 2)
    jax.block_until_ready(logits2)
    err2 = float(jnp.max(jnp.abs(logits2 - ref)))
    assert jnp.allclose(logits2, ref, rtol=5e-2, atol=5e-2), f"max abs err {err2}"

    print("KERNEL_OK")
</pallas_src>

<mosaic_0001>
module attributes {stable_mosaic.version = 11 : i64} {
  func.func @classifier_kernel(%arg0: i32, %arg1: memref<256x256xbf16, #tpu.memory_space<vmem>>, %arg2: memref<256x8xbf16, #tpu.memory_space<vmem>>, %arg3: memref<8x32xbf16, #tpu.memory_space<vmem>>, %arg4: memref<1x32xf32, #tpu.memory_space<vmem>>, %arg5: memref<32x32xbf16, #tpu.memory_space<vmem>>, %arg6: memref<1x32xf32, #tpu.memory_space<vmem>>, %arg7: memref<32x128xbf16, #tpu.memory_space<vmem>>, %arg8: memref<1x128xf32, #tpu.memory_space<vmem>>, %arg9: memref<16x128xf32, #tpu.memory_space<vmem>>) attributes {dimension_semantics = [#tpu.dimension_semantics<parallel>], iteration_bounds = array<i64: 1>, scalar_prefetch = 0 : i64, scratch_operands = 0 : i64, tpu.core_type = #tpu.core_type<tc>, window_params = [{transform_indices = @transform_0, window_bounds = array<i64: 256, 256>}, {transform_indices = @transform_1, window_bounds = array<i64: 256, 8>}, {pipeline_mode = #tpu.pipeline_mode<synchronous>, transform_indices = @transform_2, window_bounds = array<i64: 8, 32>}, {pipeline_mode = #tpu.pipeline_mode<synchronous>, transform_indices = @transform_3, window_bounds = array<i64: 1, 32>}, {pipeline_mode = #tpu.pipeline_mode<synchronous>, transform_indices = @transform_4, window_bounds = array<i64: 32, 32>}, {pipeline_mode = #tpu.pipeline_mode<synchronous>, transform_indices = @transform_5, window_bounds = array<i64: 1, 32>}, {pipeline_mode = #tpu.pipeline_mode<synchronous>, transform_indices = @transform_6, window_bounds = array<i64: 32, 128>}, {pipeline_mode = #tpu.pipeline_mode<synchronous>, transform_indices = @transform_7, window_bounds = array<i64: 1, 128>}, {transform_indices = @transform_8, window_bounds = array<i64: 16, 128>}]} {
    %c0 = arith.constant 0 : index
    %c0_0 = arith.constant 0 : index
    %0 = vector.load %arg1[%c0, %c0_0] : memref<256x256xbf16, #tpu.memory_space<vmem>>, vector<256x256xbf16>
    %c0_1 = arith.constant 0 : index
    %c0_2 = arith.constant 0 : index
    %1 = vector.load %arg2[%c0_1, %c0_2] : memref<256x8xbf16, #tpu.memory_space<vmem>>, vector<256x8xbf16>
    %c0_3 = arith.constant 0 : index
    %c0_4 = arith.constant 0 : index
    %2 = vector.load %arg3[%c0_3, %c0_4] : memref<8x32xbf16, #tpu.memory_space<vmem>>, vector<8x32xbf16>
    %cst = arith.constant dense<0.000000e+00> : vector<256x32xf32>
    %3 = tpu.matmul %1, %2, %cst {dimension_numbers = #tpu.dot_dimension_numbers<[1], [0], [0], [1], [0, 0, 1, 1], [], []>} : vector<256x8xbf16>, vector<8x32xbf16>, vector<256x32xf32> -> vector<256x32xf32>
    %4 = arith.truncf %3 : vector<256x32xf32> to vector<256x32xbf16>
    %cst_5 = arith.constant dense<0.000000e+00> : vector<256x32xf32>
    %5 = tpu.matmul %0, %4, %cst_5 {dimension_numbers = #tpu.dot_dimension_numbers<[1], [0], [0], [1], [0, 0, 1, 1], [], []>} : vector<256x256xbf16>, vector<256x32xbf16>, vector<256x32xf32> -> vector<256x32xf32>
    %c0_6 = arith.constant 0 : index
    %c0_7 = arith.constant 0 : index
    %6 = vector.load %arg4[%c0_6, %c0_7] : memref<1x32xf32, #tpu.memory_space<vmem>>, vector<1x32xf32>
    %7 = vector.broadcast %6 : vector<1x32xf32> to vector<256x32xf32>
    %8 = arith.addf %5, %7 : vector<256x32xf32>
    %cst_8 = arith.constant 0.000000e+00 : f32
    %9 = vector.broadcast %cst_8 : f32 to vector<256x32xf32>
    %10 = arith.maximumf %8, %9 : vector<256x32xf32>
    %11 = arith.truncf %10 : vector<256x32xf32> to vector<256x32xbf16>
    %c0_9 = arith.constant 0 : index
    %c0_10 = arith.constant 0 : index
    %12 = vector.load %arg5[%c0_9, %c0_10] : memref<32x32xbf16, #tpu.memory_space<vmem>>, vector<32x32xbf16>
    %cst_11 = arith.constant dense<0.000000e+00> : vector<256x32xf32>
    %13 = tpu.matmul %11, %12, %cst_11 {dimension_numbers = #tpu.dot_dimension_numbers<[1], [0], [0], [1], [0, 0, 1, 1], [], []>} : vector<256x32xbf16>, vector<32x32xbf16>, vector<256x32xf32> -> vector<256x32xf32>
    %14 = arith.truncf %13 : vector<256x32xf32> to vector<256x32xbf16>
    %cst_12 = arith.constant dense<0.000000e+00> : vector<256x32xf32>
    %15 = tpu.matmul %0, %14, %cst_12 {dimension_numbers = #tpu.dot_dimension_numbers<[1], [0], [0], [1], [0, 0, 1, 1], [], []>} : vector<256x256xbf16>, vector<256x32xbf16>, vector<256x32xf32> -> vector<256x32xf32>
    %c0_13 = arith.constant 0 : index
    %c0_14 = arith.constant 0 : index
    %16 = vector.load %arg6[%c0_13, %c0_14] : memref<1x32xf32, #tpu.memory_space<vmem>>, vector<1x32xf32>
    %17 = vector.broadcast %16 : vector<1x32xf32> to vector<256x32xf32>
    %18 = arith.addf %15, %17 : vector<256x32xf32>
    %cst_15 = arith.constant 0.000000e+00 : f32
    %19 = vector.broadcast %cst_15 : f32 to vector<256x32xf32>
    %20 = arith.maximumf %18, %19 : vector<256x32xf32>
    %21 = vector.shape_cast %20 : vector<256x32xf32> to vector<16x16x32xf32>
    %cst_16 = arith.constant dense<0xFF800000> : vector<16x32xf32>
    %22 = vector.multi_reduction <maximumf>, %21, %cst_16 [1] : vector<16x16x32xf32> to vector<16x32xf32>
    %23 = arith.truncf %22 : vector<16x32xf32> to vector<16x32xbf16>
    %c0_17 = arith.constant 0 : index
    %c0_18 = arith.constant 0 : index
    %24 = vector.load %arg7[%c0_17, %c0_18] : memref<32x128xbf16, #tpu.memory_space<vmem>>, vector<32x128xbf16>
    %cst_19 = arith.constant dense<0.000000e+00> : vector<16x128xf32>
    %25 = tpu.matmul %23, %24, %cst_19 {dimension_numbers = #tpu.dot_dimension_numbers<[1], [0], [0], [1], [0, 0, 1, 1], [], []>} : vector<16x32xbf16>, vector<32x128xbf16>, vector<16x128xf32> -> vector<16x128xf32>
    %c0_20 = arith.constant 0 : index
    %c0_21 = arith.constant 0 : index
    %26 = vector.load %arg8[%c0_20, %c0_21] : memref<1x128xf32, #tpu.memory_space<vmem>>, vector<1x128xf32>
    %27 = vector.broadcast %26 : vector<1x128xf32> to vector<16x128xf32>
    %28 = arith.addf %25, %27 : vector<16x128xf32>
    %c0_22 = arith.constant 0 : index
    %c0_23 = arith.constant 0 : index
    %29 = vector.load %arg9[%c0_22, %c0_23] : memref<16x128xf32, #tpu.memory_space<vmem>>, vector<16x128xf32>
    tpu.vector_store %arg9[%c0_22, %c0_23], %28 {strides = array<i32>} : memref<16x128xf32, #tpu.memory_space<vmem>>, vector<16x128xf32>,
    return
  }
  func.func @transform_0(%arg0: i32) -> (i32, i32) {
    %c0_i32 = arith.constant 0 : i32
    %c0_i32_0 = arith.constant 0 : i32
    return %arg0, %c0_i32 : i32, i32
  }
  func.func @transform_1(%arg0: i32) -> (i32, i32) {
    %c0_i32 = arith.constant 0 : i32
    %c0_i32_0 = arith.constant 0 : i32
    return %arg0, %c0_i32 : i32, i32
  }
  func.func @transform_2(%arg0: i32) -> (i32, i32) {
    %c0_i32 = arith.constant 0 : i32
    %c0_i32_0 = arith.constant 0 : i32
    %c0_i32_1 = arith.constant 0 : i32
    return %c0_i32, %c0_i32_0 : i32, i32
  }
  func.func @transform_3(%arg0: i32) -> (i32, i32) {
    %c0_i32 = arith.constant 0 : i32
    %c0_i32_0 = arith.constant 0 : i32
    %c0_i32_1 = arith.constant 0 : i32
    return %c0_i32, %c0_i32_0 : i32, i32
  }
  func.func @transform_4(%arg0: i32) -> (i32, i32) {
    %c0_i32 = arith.constant 0 : i32
    %c0_i32_0 = arith.constant 0 : i32
    %c0_i32_1 = arith.constant 0 : i32
    return %c0_i32, %c0_i32_0 : i32, i32
  }
  func.func @transform_5(%arg0: i32) -> (i32, i32) {
    %c0_i32 = arith.constant 0 : i32
    %c0_i32_0 = arith.constant 0 : i32
    %c0_i32_1 = arith.constant 0 : i32
    return %c0_i32, %c0_i32_0 : i32, i32
  }
  func.func @transform_6(%arg0: i32) -> (i32, i32) {
    %c0_i32 = arith.constant 0 : i32
    %c0_i32_0 = arith.constant 0 : i32
    %c0_i32_1 = arith.constant 0 : i32
    return %c0_i32, %c0_i32_0 : i32, i32
  }
  func.func @transform_7(%arg0: i32) -> (i32, i32) {
    %c0_i32 = arith.constant 0 : i32
    %c0_i32_0 = arith.constant 0 : i32
    %c0_i32_1 = arith.constant 0 : i32
    return %c0_i32, %c0_i32_0 : i32, i32
  }
  func.func @transform_8(%arg0: i32) -> (i32, i32) {
    %c0_i32 = arith.constant 0 : i32
    %c0_i32_0 = arith.constant 0 : i32
    return %arg0, %c0_i32 : i32, i32
  }
}

</mosaic_0001>

<llo_original>
// kernel: classifier_forward.1
$region0: #{classifier_forward.1}
  #allocation0 [shape = 'u32[]', space=smem, size = 0x4, offset = 0x4, fixed_abs, tag = 'smem constant byte address 0x4 - core index']
  #allocation1 [shape = 'u32[144,128]{1,0:T(1,128)}', space=vmem, size = 0x12000, scoped, tag = 'internal scratch']
  %s0 = inlined_call_operand.vmem [shape: bf16[256,256], index: 0, kind: input, shape index: {}]
  %s1 = inlined_call_operand.vmem [shape: bf16[256,8], index: 1, kind: input, shape index: {}]
  %s2 = inlined_call_operand.vmem [shape: bf16[8,32], index: 2, kind: input, shape index: {}]
  %s3 = inlined_call_operand.vmem [shape: f32[1,32], index: 3, kind: input, shape index: {}]
  %s4 = inlined_call_operand.vmem [shape: bf16[32,32], index: 4, kind: input, shape index: {}]
  %s5 = inlined_call_operand.vmem [shape: f32[1,32], index: 5, kind: input, shape index: {}]
  %s6 = inlined_call_operand.vmem [shape: bf16[32,128], index: 6, kind: input, shape index: {}]
  %s7 = inlined_call_operand.vmem [shape: f32[1,128], index: 7, kind: input, shape index: {}]
  %s8 = inlined_call_operand.vmem [shape: f32[16,128], index: 8, kind: output, shape index: {}]
  %s9 = sld [smem:[#allocation0]]
  $region42: #{classifier_forward.1} parent=0
    _
  %s11 = ssub.s32 1, %s9
  %s12 = scalar_select 0, %s11, %s9
  // Predicated region
  $region2: #{classifier_forward.1} parent=0 // pred_check
    _
  $region3: #{classifier_forward.1} parent=0 // pred_check_branch
    %14 = sbr.rel (0) target = $region5
  $region4: #{classifier_forward.1} parent=0 // pred_region
    _
  $region5: #{classifier_forward.1} parent=0 // pred_fallthru
    _
  // Predicated region
  $region6: #{classifier_forward.1} parent=0 // pred_check
    _
  $region7: #{classifier_forward.1} parent=0 // pred_check_branch
    %16 = sbr.rel (0) target = $region9
  $region8: #{classifier_forward.1} parent=0 // pred_region
    _
  $region9: #{classifier_forward.1} parent=0 // pred_fallthru
    _
  // Predicated region
  $region10: #{classifier_forward.1} parent=0 // pred_check
    _
  $region11: #{classifier_forward.1} parent=0 // pred_check_branch
    %18 = sbr.rel (0) target = $region13
  $region12: #{classifier_forward.1} parent=0 // pred_region
    _
  $region13: #{classifier_forward.1} parent=0 // pred_fallthru
    _
  // Predicated region
  $region14: #{classifier_forward.1} parent=0 // pred_check
    _
  $region15: #{classifier_forward.1} parent=0 // pred_check_branch
    %20 = sbr.rel (0) target = $region17
  $region16: #{classifier_forward.1} parent=0 // pred_region
    _
  $region17: #{classifier_forward.1} parent=0 // pred_fallthru
    _
  // Predicated region
  $region18: #{classifier_forward.1} parent=0 // pred_check
    _
  $region19: #{classifier_forward.1} parent=0 // pred_check_branch
    %22 = sbr.rel (0) target = $region21
  $region20: #{classifier_forward.1} parent=0 // pred_region
    _
  $region21: #{classifier_forward.1} parent=0 // pred_fallthru
    _
  // Predicated region
  $region22: #{classifier_forward.1} parent=0 // pred_check
    _
  $region23: #{classifier_forward.1} parent=0 // pred_check_branch
    %24 = sbr.rel (0) target = $region25
  $region24: #{classifier_forward.1} parent=0 // pred_region
    _
  $region25: #{classifier_forward.1} parent=0 // pred_fallthru
    _
  // Predicated region
  $region26: #{classifier_forward.1} parent=0 // pred_check
    _
  $region27: #{classifier_forward.1} parent=0 // pred_check_branch
    %26 = sbr.rel (0) target = $region29
  $region28: #{classifier_forward.1} parent=0 // pred_region
    _
  $region29: #{classifier_forward.1} parent=0 // pred_fallthru
    _
  // Predicated region
  $region30: #{classifier_forward.1} parent=0 // pred_check
    _
  $region31: #{classifier_forward.1} parent=0 // pred_check_branch
    %28 = sbr.rel (0) target = $region33
  $region32: #{classifier_forward.1} parent=0 // pred_region
    _
  $region33: #{classifier_forward.1} parent=0 // pred_fallthru
    _
  %v30 = vld [vmem:[%s0] sm:$0xff]
  %v31 = vld [vmem:[%s0 + $0x8] sm:$0xff]
  %v32 = vld [vmem:[%s0 + $0x10] sm:$0xff]
  %v33 = vld [vmem:[%s0 + $0x18] sm:$0xff]
  %v34 = vld [vmem:[%s0 + $0x20] sm:$0xff]
  %v35 = vld [vmem:[%s0 + $0x28] sm:$0xff]
  %v36 = vld [vmem:[%s0 + $0x30] sm:$0xff]
  %v37 = vld [vmem:[%s0 + $0x38] sm:$0xff]
  %v38 = vld [vmem:[%s0 + $0x40] sm:$0xff]
  %v39 = vld [vmem:[%s0 + $0x48] sm:$0xff]
  %v40 = vld [vmem:[%s0 + $0x50] sm:$0xff]
  %v41 = vld [vmem:[%s0 + $0x58] sm:$0xff]
  %v42 = vld [vmem:[%s0 + $0x60] sm:$0xff]
  %v43 = vld [vmem:[%s0 + $0x68] sm:$0xff]
  %v44 = vld [vmem:[%s0 + $0x70] sm:$0xff]
  %v45 = vld [vmem:[%s0 + $0x78] sm:$0xff]
  %v46 = vld [vmem:[%s0 + $0x80] sm:$0xff]
  %v47 = vld [vmem:[%s0 + $0x88] sm:$0xff]
  %v48 = vld [vmem:[%s0 + $0x90] sm:$0xff]
  %v49 = vld [vmem:[%s0 + $0x98] sm:$0xff]
  %v50 = vld [vmem:[%s0 + $0xa0] sm:$0xff]
  %v51 = vld [vmem:[%s0 + $0xa8] sm:$0xff]
  %v52 = vld [vmem:[%s0 + $0xb0] sm:$0xff]
  %v53 = vld [vmem:[%s0 + $0xb8] sm:$0xff]
  %v54 = vld [vmem:[%s0 + $0xc0] sm:$0xff]
  %v55 = vld [vmem:[%s0 + $0xc8] sm:$0xff]
  %v56 = vld [vmem:[%s0 + $0xd0] sm:$0xff]
  %v57 = vld [vmem:[%s0 + $0xd8] sm:$0xff]
  %v58 = vld [vmem:[%s0 + $0xe0] sm:$0xff]
  %v59 = vld [vmem:[%s0 + $0xe8] sm:$0xff]
  %v60 = vld [vmem:[%s0 + $0xf0] sm:$0xff]
  %v61 = vld [vmem:[%s0 + $0xf8] sm:$0xff]
  %v62 = vld [vmem:[%s1] sm:$0xf]
  %v63 = vld [vmem:[%s1 + $0x4] sm:$0xf]
  %v64 = vld [vmem:[%s1 + $0x8] sm:$0xf]
  %v65 = vld [vmem:[%s1 + $0xc] sm:$0xf]
  %v66 = vld [vmem:[%s1 + $0x10] sm:$0xf]
  %v67 = vld [vmem:[%s1 + $0x14] sm:$0xf]
  %v68 = vld [vmem:[%s1 + $0x18] sm:$0xf]
  %v69 = vld [vmem:[%s1 + $0x1c] sm:$0xf]
  %v70 = vld [vmem:[%s1 + $0x20] sm:$0xf]
  %v71 = vld [vmem:[%s1 + $0x24] sm:$0xf]
  %v72 = vld [vmem:[%s1 + $0x28] sm:$0xf]
  %v73 = vld [vmem:[%s1 + $0x2c] sm:$0xf]
  %v74 = vld [vmem:[%s1 + $0x30] sm:$0xf]
  %v75 = vld [vmem:[%s1 + $0x34] sm:$0xf]
  %v76 = vld [vmem:[%s1 + $0x38] sm:$0xf]
  %v77 = vld [vmem:[%s1 + $0x3c] sm:$0xf]
  %v78 = vld [vmem:[%s1 + $0x40] sm:$0xf]
  %v79 = vld [vmem:[%s1 + $0x44] sm:$0xf]
  %v80 = vld [vmem:[%s1 + $0x48] sm:$0xf]
  %v81 = vld [vmem:[%s1 + $0x4c] sm:$0xf]
  %v82 = vld [vmem:[%s1 + $0x50] sm:$0xf]
  %v83 = vld [vmem:[%s1 + $0x54] sm:$0xf]
  %v84 = vld [vmem:[%s1 + $0x58] sm:$0xf]
  %v85 = vld [vmem:[%s1 + $0x5c] sm:$0xf]
  %v86 = vld [vmem:[%s1 + $0x60] sm:$0xf]
  %v87 = vld [vmem:[%s1 + $0x64] sm:$0xf]
  %v88 = vld [vmem:[%s1 + $0x68] sm:$0xf]
  %v89 = vld [vmem:[%s1 + $0x6c] sm:$0xf]
  %v90 = vld [vmem:[%s1 + $0x70] sm:$0xf]
  %v91 = vld [vmem:[%s1 + $0x74] sm:$0xf]
  %v92 = vld [vmem:[%s1 + $0x78] sm:$0xf]
  %v93 = vld [vmem:[%s1 + $0x7c] sm:$0xf]
  %v94 = vld [vmem:[%s2] sm:$0xf]
  %v127 = vunpack.c.l.b16 %v62
  %v128 = vunpack.c.l.b16 %v63
  %v129 = vunpack.c.l.b16 %v64
  %v130 = vunpack.c.l.b16 %v65
  %v131 = vunpack.c.l.b16 %v66
  %v132 = vunpack.c.l.b16 %v67
  %v133 = vunpack.c.l.b16 %v68
  %v134 = vunpack.c.l.b16 %v69
  %v135 = vunpack.c.l.b16 %v70
  %v136 = vunpack.c.l.b16 %v71
  %v137 = vunpack.c.l.b16 %v72
  %v138 = vunpack.c.l.b16 %v73
  %v139 = vunpack.c.l.b16 %v74
  %v140 = vunpack.c.l.b16 %v75
  %v141 = vunpack.c.l.b16 %v76
  %v142 = vunpack.c.l.b16 %v77
  %v143 = vunpack.c.l.b16 %v78
  %v144 = vunpack.c.l.b16 %v79
  %v145 = vunpack.c.l.b16 %v80
  %v146 = vunpack.c.l.b16 %v81
  %v147 = vunpack.c.l.b16 %v82
  %v148 = vunpack.c.l.b16 %v83
  %v149 = vunpack.c.l.b16 %v84
  %v150 = vunpack.c.l.b16 %v85
  %v151 = vunpack.c.l.b16 %v86
  %v152 = vunpack.c.l.b16 %v87
  %v153 = vunpack.c.l.b16 %v88
  %v154 = vunpack.c.l.b16 %v89
  %v155 = vunpack.c.l.b16 %v90
  %v156 = vunpack.c.l.b16 %v91
  %v157 = vunpack.c.l.b16 %v92
  %v158 = vunpack.c.l.b16 %v93
  %v159 = vpack.c.b16 %v128, %v127
  %v160 = vpack.c.b16 %v130, %v129
  %v161 = vpack.c.b16 %v132, %v131
  %v162 = vpack.c.b16 %v134, %v133
  %v163 = vpack.c.b16 %v136, %v135
  %v164 = vpack.c.b16 %v138, %v137
  %v165 = vpack.c.b16 %v140, %v139
  %v166 = vpack.c.b16 %v142, %v141
  %v167 = vpack.c.b16 %v144, %v143
  %v168 = vpack.c.b16 %v146, %v145
  %v169 = vpack.c.b16 %v148, %v147
  %v170 = vpack.c.b16 %v150, %v149
  %v171 = vpack.c.b16 %v152, %v151
  %v172 = vpack.c.b16 %v154, %v153
  %v173 = vpack.c.b16 %v156, %v155
  %v174 = vpack.c.b16 %v158, %v157
  %vm175 = vcmask 64512
  %v177 = vsel %vm175, %v159, 0
  %v180 = vsel %vm175, %v160, 0
  %v183 = vsel %vm175, %v161, 0
  %v186 = vsel %vm175, %v162, 0
  %v189 = vsel %vm175, %v163, 0
  %v192 = vsel %vm175, %v164, 0
  %v195 = vsel %vm175, %v165, 0
  %v198 = vsel %vm175, %v166, 0
  %v201 = vsel %vm175, %v167, 0
  %v204 = vsel %vm175, %v168, 0
  %v207 = vsel %vm175, %v169, 0
  %v210 = vsel %vm175, %v170, 0
  %v213 = vsel %vm175, %v171, 0
  %v216 = vsel %vm175, %v172, 0
  %v219 = vsel %vm175, %v173, 0
  %v222 = vsel %vm175, %v174, 0
  %vm224 = vcmask 1043456
  %v226 = vsel %vm224, %v94, 0
  %228 = vmatprep.subr.bf16.mxu0 0
  %229 = vmatpush1.bf16.msra.mxu0 0
  %230 = vmatprep.subr.bf16.mxu0 0
  %231 = vmatpush1.bf16.msra.mxu0 0
  %232 = vmatprep.subr.bf16.mxu0 0
  %233 = vmatpush1.bf16.msra.mxu0 0
  %234 = vmatprep.subr.bf16.mxu0 0
  %235 = vmatpush1.bf16.msra.mxu0 0
  %236 = vmatprep.subr.bf16.mxu0 0
  %237 = vmatpush1.bf16.msra.mxu0 0
  %238 = vmatprep.subr.bf16.mxu0 0
  %239 = vmatpush1.bf16.msra.mxu0 0
  %240 = vmatprep.subr.bf16.mxu0 0
  %241 = vmatpush1.bf16.msra.mxu0 0
  %242 = vmatprep.subr.bf16.mxu0 0
  %243 = vmatpush1.bf16.msra.mxu0 %v226
  %244 = vmatprep.subr.bf16.mxu0 0
  %245 = vmatpush2.bf16.msra.mxu0 0
  %246 = vmatprep.subr.bf16.mxu0 0
  %247 = vmatpush2.bf16.msra.mxu0 0
  %248 = vmatprep.subr.bf16.mxu0 0
  %249 = vmatpush2.bf16.msra.mxu0 0
  %250 = vmatprep.subr.bf16.mxu0 0
  %251 = vmatpush2.bf16.msra.mxu0 0
  %252 = vmatprep.subr.bf16.mxu0 0
  %253 = vmatpush2.bf16.msra.mxu0 0
  %254 = vmatprep.subr.bf16.mxu0 0
  %255 = vmatpush2.bf16.msra.mxu0 0
  %256 = vmatprep.subr.bf16.mxu0 0
  %257 = vmatpush2.bf16.msra.mxu0 0
  %258 = vmatprep.subr.bf16.mxu0 0
  %259 = vmatpush2.bf16.msra.mxu0 0
  %260 = vmatprep.mubr.bf16.mxu0 0
  %261 = vmatmul.mubr.bf16.gmra.mxu0 %v177
  %v262 = vpop.f32.mrf.mxu0
  %v263 = vadd.f32 0.0, %v262
  %v264 = vpop.f32.mrf.mxu0
  %v265 = vpop.f32.mrf.mxu0
  %v266 = vadd.f32 0.0, %v265
  %v267 = vpop.f32.mrf.mxu0
  %268 = vmatprep.mubr.bf16.mxu0 0
  %269 = vmatmul.mubr.bf16.gmra.mxu0 %v180
  %v270 = vpop.f32.mrf.mxu0
  %v271 = vadd.f32 0.0, %v270
  %v272 = vpop.f32.mrf.mxu0
  %v273 = vpop.f32.mrf.mxu0
  %v274 = vadd.f32 0.0, %v273
  %v275 = vpop.f32.mrf.mxu0
  %276 = vmatprep.mubr.bf16.mxu0 0
  %277 = vmatmul.mubr.bf16.gmra.mxu0 %v183
  %v278 = vpop.f32.mrf.mxu0
  %v279 = vadd.f32 0.0, %v278
  %v280 = vpop.f32.mrf.mxu0
  %v281 = vpop.f32.mrf.mxu0
  %v282 = vadd.f32 0.0, %v281
  %v283 = vpop.f32.mrf.mxu0
  %284 = vmatprep.mubr.bf16.mxu0 0
  %285 = vmatmul.mubr.bf16.gmra.mxu0 %v186
  %v286 = vpop.f32.mrf.mxu0
  %v287 = vadd.f32 0.0, %v286
  %v288 = vpop.f32.mrf.mxu0
  %v289 = vpop.f32.mrf.mxu0
  %v290 = vadd.f32 0.0, %v289
  %v291 = vpop.f32.mrf.mxu0
  %292 = vmatprep.mubr.bf16.mxu0 0
  %293 = vmatmul.mubr.bf16.gmra.mxu0 %v189
  %v294 = vpop.f32.mrf.mxu0
  %v295 = vadd.f32 0.0, %v294
  %v296 = vpop.f32.mrf.mxu0
  %v297 = vpop.f32.mrf.mxu0
  %v298 = vadd.f32 0.0, %v297
  %v299 = vpop.f32.mrf.mxu0
  %300 = vmatprep.mubr.bf16.mxu0 0
  %301 = vmatmul.mubr.bf16.gmra.mxu0 %v192
  %v302 = vpop.f32.mrf.mxu0
  %v303 = vadd.f32 0.0, %v302
  %v304 = vpop.f32.mrf.mxu0
  %v305 = vpop.f32.mrf.mxu0
  %v306 = vadd.f32 0.0, %v305
  %v307 = vpop.f32.mrf.mxu0
  %308 = vmatprep.mubr.bf16.mxu0 0
  %309 = vmatmul.mubr.bf16.gmra.mxu0 %v195
  %v310 = vpop.f32.mrf.mxu0
  %v311 = vadd.f32 0.0, %v310
  %v312 = vpop.f32.mrf.mxu0
  %v313 = vpop.f32.mrf.mxu0
  %v314 = vadd.f32 0.0, %v313
  %v315 = vpop.f32.mrf.mxu0
  %316 = vmatprep.mubr.bf16.mxu0 0
  %317 = vmatmul.mubr.bf16.gmra.mxu0 %v198
  %v318 = vpop.f32.mrf.mxu0
  %v319 = vadd.f32 0.0, %v318
  %v320 = vpop.f32.mrf.mxu0
  %v321 = vpop.f32.mrf.mxu0
  %v322 = vadd.f32 0.0, %v321
  %v323 = vpop.f32.mrf.mxu0
  %324 = vmatprep.mubr.bf16.mxu0 0
  %325 = vmatmul.mubr.bf16.gmra.mxu0 %v201
  %v326 = vpop.f32.mrf.mxu0
  %v327 = vadd.f32 0.0, %v326
  %v328 = vpop.f32.mrf.mxu0
  %v329 = vpop.f32.mrf.mxu0
  %v330 = vadd.f32 0.0, %v329
  %v331 = vpop.f32.mrf.mxu0
  %332 = vmatprep.mubr.bf16.mxu0 0
  %333 = vmatmul.mubr.bf16.gmra.mxu0 %v204
  %v334 = vpop.f32.mrf.mxu0
  %v335 = vadd.f32 0.0, %v334
  %v336 = vpop.f32.mrf.mxu0
  %v337 = vpop.f32.mrf.mxu0
  %v338 = vadd.f32 0.0, %v337
  %v339 = vpop.f32.mrf.mxu0
  %340 = vmatprep.mubr.bf16.mxu0 0
  %341 = vmatmul.mubr.bf16.gmra.mxu0 %v207
  %v342 = vpop.f32.mrf.mxu0
  %v343 = vadd.f32 0.0, %v342
  %v344 = vpop.f32.mrf.mxu0
  %v345 = vpop.f32.mrf.mxu0
  %v346 = vadd.f32 0.0, %v345
  %v347 = vpop.f32.mrf.mxu0
  %348 = vmatprep.mubr.bf16.mxu0 0
  %349 = vmatmul.mubr.bf16.gmra.mxu0 %v210
  %v350 = vpop.f32.mrf.mxu0
  %v351 = vadd.f32 0.0, %v350
  %v352 = vpop.f32.mrf.mxu0
  %v353 = vpop.f32.mrf.mxu0
  %v354 = vadd.f32 0.0, %v353
  %v355 = vpop.f32.mrf.mxu0
  %356 = vmatprep.mubr.bf16.mxu0 0
  %357 = vmatmul.mubr.bf16.gmra.mxu0 %v213
  %v358 = vpop.f32.mrf.mxu0
  %v359 = vadd.f32 0.0, %v358
  %v360 = vpop.f32.mrf.mxu0
  %v361 = vpop.f32.mrf.mxu0
  %v362 = vadd.f32 0.0, %v361
  %v363 = vpop.f32.mrf.mxu0
  %364 = vmatprep.mubr.bf16.mxu0 0
  %365 = vmatmul.mubr.bf16.gmra.mxu0 %v216
  %v366 = vpop.f32.mrf.mxu0
  %v367 = vadd.f32 0.0, %v366
  %v368 = vpop.f32.mrf.mxu0
  %v369 = vpop.f32.mrf.mxu0
  %v370 = vadd.f32 0.0, %v369
  %v371 = vpop.f32.mrf.mxu0
  %372 = vmatprep.mubr.bf16.mxu0 0
  %373 = vmatmul.mubr.bf16.gmra.mxu0 %v219
  %v374 = vpop.f32.mrf.mxu0
  %v375 = vadd.f32 0.0, %v374
  %v376 = vpop.f32.mrf.mxu0
  %v377 = vpop.f32.mrf.mxu0
  %v378 = vadd.f32 0.0, %v377
  %v379 = vpop.f32.mrf.mxu0
  %380 = vmatprep.mubr.bf16.mxu0 0
  %381 = vmatmul.mubr.bf16.gmra.mxu0 %v222
  %v382 = vpop.f32.mrf.mxu0
  %v383 = vadd.f32 0.0, %v382
  %v384 = vpop.f32.mrf.mxu0
  %v385 = vpop.f32.mrf.mxu0
  %v386 = vadd.f32 0.0, %v385
  %v387 = vpop.f32.mrf.mxu0
  %388 = vdwg.mxu0
  %v389 = vpack.c.bf16 %v266, %v263
  %v390 = vpack.c.bf16 %v274, %v271
  %v391 = vpack.c.bf16 %v282, %v279
  %v392 = vpack.c.bf16 %v290, %v287
  %v393 = vpack.c.bf16 %v298, %v295
  %v394 = vpack.c.bf16 %v306, %v303
  %v395 = vpack.c.bf16 %v314, %v311
  %v396 = vpack.c.bf16 %v322, %v319
  %v397 = vpack.c.bf16 %v330, %v327
  %v398 = vpack.c.bf16 %v338, %v335
  %v399 = vpack.c.bf16 %v346, %v343
  %v400 = vpack.c.bf16 %v354, %v351
  %v401 = vpack.c.bf16 %v362, %v359
  %v402 = vpack.c.bf16 %v370, %v367
  %v403 = vpack.c.bf16 %v378, %v375
  %v404 = vpack.c.bf16 %v386, %v383
  %v405 = vld [vmem:[%s3] sm:$0x1]
  %v407 = vlaneseq
  %v408 = vshrl.u32 %v407, 7
  %v409 = vsub.s32 0, %v408
  %v410 = vrot.slane %v405, %v409
  %v444 = vunpack.c.l.b16 %v30
  %v445 = vunpack.c.h.b16 %v30
  %v446 = vunpack.c.l.b16 %v31
  %v447 = vunpack.c.h.b16 %v31
  %v448 = vunpack.c.l.b16 %v32
  %v449 = vunpack.c.h.b16 %v32
  %v450 = vunpack.c.l.b16 %v33
  %v451 = vunpack.c.h.b16 %v33
  %v452 = vunpack.c.l.b16 %v34
  %v453 = vunpack.c.h.b16 %v34
  %v454 = vunpack.c.l.b16 %v35
  %v455 = vunpack.c.h.b16 %v35
  %v456 = vunpack.c.l.b16 %v36
  %v457 = vunpack.c.h.b16 %v36
  %v458 = vunpack.c.l.b16 %v37
  %v459 = vunpack.c.h.b16 %v37
  %v460 = vunpack.c.l.b16 %v38
  %v461 = vunpack.c.h.b16 %v38
  %v462 = vunpack.c.l.b16 %v39
  %v463 = vunpack.c.h.b16 %v39
  %v464 = vunpack.c.l.b16 %v40
  %v465 = vunpack.c.h.b16 %v40
  %v466 = vunpack.c.l.b16 %v41
  %v467 = vunpack.c.h.b16 %v41
  %v468 = vunpack.c.l.b16 %v42
  %v469 = vunpack.c.h.b16 %v42
  %v470 = vunpack.c.l.b16 %v43
  %v471 = vunpack.c.h.b16 %v43
  %v472 = vunpack.c.l.b16 %v44
  %v473 = vunpack.c.h.b16 %v44
  %v474 = vunpack.c.l.b16 %v45
  %v475 = vunpack.c.h.b16 %v45
  %v476 = vunpack.c.l.b16 %v46
  %v477 = vunpack.c.h.b16 %v46
  %v478 = vunpack.c.l.b16 %v47
  %v479 = vunpack.c.h.b16 %v47
  %v480 = vunpack.c.l.b16 %v48
  %v481 = vunpack.c.h.b16 %v48
  %v482 = vunpack.c.l.b16 %v49
  %v483 = vunpack.c.h.b16 %v49
  %v484 = vunpack.c.l.b16 %v50
  %v485 = vunpack.c.h.b16 %v50
  %v486 = vunpack.c.l.b16 %v51
  %v487 = vunpack.c.h.b16 %v51
  %v488 = vunpack.c.l.b16 %v52
  %v489 = vunpack.c.h.b16 %v52
  %v490 = vunpack.c.l.b16 %v53
  %v491 = vunpack.c.h.b16 %v53
  %v492 = vunpack.c.l.b16 %v54
  %v493 = vunpack.c.h.b16 %v54
  %v494 = vunpack.c.l.b16 %v55
  %v495 = vunpack.c.h.b16 %v55
  %v496 = vunpack.c.l.b16 %v56
  %v497 = vunpack.c.h.b16 %v56
  %v498 = vunpack.c.l.b16 %v57
  %v499 = vunpack.c.h.b16 %v57
  %v500 = vunpack.c.l.b16 %v58
  %v501 = vunpack.c.h.b16 %v58
  %v502 = vunpack.c.l.b16 %v59
  %v503 = vunpack.c.h.b16 %v59
  %v504 = vunpack.c.l.b16 %v60
  %v505 = vunpack.c.h.b16 %v60
  %v506 = vunpack.c.l.b16 %v61
  %v507 = vunpack.c.h.b16 %v61
  %v508 = vpack.c.b16 %v446, %v444
  %v509 = vpack.c.b16 %v447, %v445
  %v510 = vpack.c.b16 %v450, %v448
  %v511 = vpack.c.b16 %v451, %v449
  %v512 = vpack.c.b16 %v454, %v452
  %v513 = vpack.c.b16 %v455, %v453
  %v514 = vpack.c.b16 %v458, %v456
  %v515 = vpack.c.b16 %v459, %v457
  %v516 = vpack.c.b16 %v462, %v460
  %v517 = vpack.c.b16 %v463, %v461
  %v518 = vpack.c.b16 %v466, %v464
  %v519 = vpack.c.b16 %v467, %v465
  %v520 = vpack.c.b16 %v470, %v468
  %v521 = vpack.c.b16 %v471, %v469
  %v522 = vpack.c.b16 %v474, %v472
  %v523 = vpack.c.b16 %v475, %v473
  %v524 = vpack.c.b16 %v478, %v476
  %v525 = vpack.c.b16 %v479, %v477
  %v526 = vpack.c.b16 %v482, %v480
  %v527 = vpack.c.b16 %v483, %v481
  %v528 = vpack.c.b16 %v486, %v484
  %v529 = vpack.c.b16 %v487, %v485
  %v530 = vpack.c.b16 %v490, %v488
  %v531 = vpack.c.b16 %v491, %v489
  %v532 = vpack.c.b16 %v494, %v492
  %v533 = vpack.c.b16 %v495, %v493
  %v534 = vpack.c.b16 %v498, %v496
  %v535 = vpack.c.b16 %v499, %v497
  %v536 = vpack.c.b16 %v502, %v500
  %v537 = vpack.c.b16 %v503, %v501
  %v538 = vpack.c.b16 %v506, %v504
  %v539 = vpack.c.b16 %v507, %v505
  %572 = vmatprep.subr.bf16.mxu0 0
  %573 = vmatpush1.bf16.msra.mxu0 %v396
  %574 = vmatprep.subr.bf16.mxu0 0
  %575 = vmatpush1.bf16.msra.mxu0 %v395
  %576 = vmatprep.subr.bf16.mxu0 0
  %577 = vmatpush1.bf16.msra.mxu0 %v394
  %578 = vmatprep.subr.bf16.mxu0 0
  %579 = vmatpush1.bf16.msra.mxu0 %v393
  %580 = vmatprep.subr.bf16.mxu0 0
  %581 = vmatpush1.bf16.msra.mxu0 %v392
  %582 = vmatprep.subr.bf16.mxu0 0
  %583 = vmatpush1.bf16.msra.mxu0 %v391
  %584 = vmatprep.subr.bf16.mxu0 0
  %585 = vmatpush1.bf16.msra.mxu0 %v390
  %586 = vmatprep.subr.bf16.mxu0 0
  %587 = vmatpush1.bf16.msra.mxu0 %v389
  %588 = vmatprep.subr.bf16.mxu0 0
  %589 = vmatpush2.bf16.msra.mxu0 %v404
  %590 = vmatprep.subr.bf16.mxu0 0
  %591 = vmatpush2.bf16.msra.mxu0 %v403
  %592 = vmatprep.subr.bf16.mxu0 0
  %593 = vmatpush2.bf16.msra.mxu0 %v402
  %594 = vmatprep.subr.bf16.mxu0 0
  %595 = vmatpush2.bf16.msra.mxu0 %v401
  %596 = vmatprep.subr.bf16.mxu0 0
  %597 = vmatpush2.bf16.msra.mxu0 %v400
  %598 = vmatprep.subr.bf16.mxu0 0
  %599 = vmatpush2.bf16.msra.mxu0 %v399
  %600 = vmatprep.subr.bf16.mxu0 0
  %601 = vmatpush2.bf16.msra.mxu0 %v398
  %602 = vmatprep.subr.bf16.mxu0 0
  %603 = vmatpush2.bf16.msra.mxu0 %v397
  %604 = vmatprep.mubr.bf16.mxu0 %v509
  %605 = vmatmul.mubr.bf16.gmra.mxu0 %v508
  %v606 = vpop.f32.mrf.mxu0
  %v607 = vadd.f32 %v410, %v606
  %v608 = vpop.f32.mrf.mxu0
  %v609 = vpop.f32.mrf.mxu0
  %v610 = vadd.f32 %v410, %v609
  %v611 = vpop.f32.mrf.mxu0
  %612 = vmatprep.mubr.bf16.mxu0 %v511
  %613 = vmatmul.mubr.bf16.gmra.mxu0 %v510
  %v614 = vpop.f32.mrf.mxu0
  %v615 = vadd.f32 %v410, %v614
  %v616 = vpop.f32.mrf.mxu0
  %v617 = vpop.f32.mrf.mxu0
  %v618 = vadd.f32 %v410, %v617
  %v619 = vpop.f32.mrf.mxu0
  %620 = vmatprep.mubr.bf16.mxu0 %v513
  %621 = vmatmul.mubr.bf16.gmra.mxu0 %v512
  %v622 = vpop.f32.mrf.mxu0
  %v623 = vadd.f32 %v410, %v622
  %v624 = vpop.f32.mrf.mxu0
  %v625 = vpop.f32.mrf.mxu0
  %v626 = vadd.f32 %v410, %v625
  %v627 = vpop.f32.mrf.mxu0
  %628 = vmatprep.mubr.bf16.mxu0 %v515
  %629 = vmatmul.mubr.bf16.gmra.mxu0 %v514
  %v630 = vpop.f32.mrf.mxu0
  %v631 = vadd.f32 %v410, %v630
  %v632 = vpop.f32.mrf.mxu0
  %v633 = vpop.f32.mrf.mxu0
  %v634 = vadd.f32 %v410, %v633
  %v635 = vpop.f32.mrf.mxu0
  %636 = vmatprep.mubr.bf16.mxu0 %v517
  %637 = vmatmul.mubr.bf16.gmra.mxu0 %v516
  %v638 = vpop.f32.mrf.mxu0
  %v639 = vadd.f32 %v410, %v638
  %v640 = vpop.f32.mrf.mxu0
  %v641 = vpop.f32.mrf.mxu0
  %v642 = vadd.f32 %v410, %v641
  %v643 = vpop.f32.mrf.mxu0
  %644 = vmatprep.mubr.bf16.mxu0 %v519
  %645 = vmatmul.mubr.bf16.gmra.mxu0 %v518
  %v646 = vpop.f32.mrf.mxu0
  %v647 = vadd.f32 %v410, %v646
  %v648 = vpop.f32.mrf.mxu0
  %v649 = vpop.f32.mrf.mxu0
  %v650 = vadd.f32 %v410, %v649
  %v651 = vpop.f32.mrf.mxu0
  %652 = vmatprep.mubr.bf16.mxu0 %v521
  %653 = vmatmul.mubr.bf16.gmra.mxu0 %v520
  %v654 = vpop.f32.mrf.mxu0
  %v655 = vadd.f32 %v410, %v654
  %v656 = vpop.f32.mrf.mxu0
  %v657 = vpop.f32.mrf.mxu0
  %v658 = vadd.f32 %v410, %v657
  %v659 = vpop.f32.mrf.mxu0
  %660 = vmatprep.mubr.bf16.mxu0 %v523
  %661 = vmatmul.mubr.bf16.gmra.mxu0 %v522
  %v662 = vpop.f32.mrf.mxu0
  %v663 = vadd.f32 %v410, %v662
  %v664 = vpop.f32.mrf.mxu0
  %v665 = vpop.f32.mrf.mxu0
  %v666 = vadd.f32 %v410, %v665
  %v667 = vpop.f32.mrf.mxu0
  %668 = vmatprep.mubr.bf16.mxu0 %v525
  %669 = vmatmul.mubr.bf16.gmra.mxu0 %v524
  %v670 = vpop.f32.mrf.mxu0
  %v671 = vadd.f32 %v410, %v670
  %v672 = vpop.f32.mrf.mxu0
  %v673 = vpop.f32.mrf.mxu0
  %v674 = vadd.f32 %v410, %v673
  %v675 = vpop.f32.mrf.mxu0
  %676 = vmatprep.mubr.bf16.mxu0 %v527
  %677 = vmatmul.mubr.bf16.gmra.mxu0 %v526
  %v678 = vpop.f32.mrf.mxu0
  %v679 = vadd.f32 %v410, %v678
  %v680 = vpop.f32.mrf.mxu0
  %v681 = vpop.f32.mrf.mxu0
  %v682 = vadd.f32 %v410, %v681
  %v683 = vpop.f32.mrf.mxu0
  %684 = vmatprep.mubr.bf16.mxu0 %v529
  %685 = vmatmul.mubr.bf16.gmra.mxu0 %v528
  %v686 = vpop.f32.mrf.mxu0
  %v687 = vadd.f32 %v410, %v686
  %v688 = vpop.f32.mrf.mxu0
  %v689 = vpop.f32.mrf.mxu0
  %v690 = vadd.f32 %v410, %v689
  %v691 = vpop.f32.mrf.mxu0
  %692 = vmatprep.mubr.bf16.mxu0 %v531
  %693 = vmatmul.mubr.bf16.gmra.mxu0 %v530
  %v694 = vpop.f32.mrf.mxu0
  %v695 = vadd.f32 %v410, %v694
  %v696 = vpop.f32.mrf.mxu0
  %v697 = vpop.f32.mrf.mxu0
  %v698 = vadd.f32 %v410, %v697
  %v699 = vpop.f32.mrf.mxu0
  %700 = vmatprep.mubr.bf16.mxu0 %v533
  %701 = vmatmul.mubr.bf16.gmra.mxu0 %v532
  %v702 = vpop.f32.mrf.mxu0
  %v703 = vadd.f32 %v410, %v702
  %v704 = vpop.f32.mrf.mxu0
  %v705 = vpop.f32.mrf.mxu0
  %v706 = vadd.f32 %v410, %v705
  %v707 = vpop.f32.mrf.mxu0
  %708 = vmatprep.mubr.bf16.mxu0 %v535
  %709 = vmatmul.mubr.bf16.gmra.mxu0 %v534
  %v710 = vpop.f32.mrf.mxu0
  %v711 = vadd.f32 %v410, %v710
  %v712 = vpop.f32.mrf.mxu0
  %v713 = vpop.f32.mrf.mxu0
  %v714 = vadd.f32 %v410, %v713
  %v715 = vpop.f32.mrf.mxu0
  %716 = vmatprep.mubr.bf16.mxu0 %v537
  %717 = vmatmul.mubr.bf16.gmra.mxu0 %v536
  %v718 = vpop.f32.mrf.mxu0
  %v719 = vadd.f32 %v410, %v718
  %v720 = vpop.f32.mrf.mxu0
  %v721 = vpop.f32.mrf.mxu0
  %v722 = vadd.f32 %v410, %v721
  %v723 = vpop.f32.mrf.mxu0
  %724 = vmatprep.mubr.bf16.mxu0 %v539
  %725 = vmatmul.mubr.bf16.gmra.mxu0 %v538
  %v726 = vpop.f32.mrf.mxu0
  %v727 = vadd.f32 %v410, %v726
  %v728 = vpop.f32.mrf.mxu0
  %v729 = vpop.f32.mrf.mxu0
  %v730 = vadd.f32 %v410, %v729
  %v731 = vpop.f32.mrf.mxu0
  %732 = vdwg.mxu0
  %v733 = vmax.f32 %v607, 0.0
  %v734 = vmax.f32 %v610, 0.0
  %v735 = vmax.f32 %v615, 0.0
  %v736 = vmax.f32 %v618, 0.0
  %v737 = vmax.f32 %v623, 0.0
  %v738 = vmax.f32 %v626, 0.0
  %v739 = vmax.f32 %v631, 0.0
  %v740 = vmax.f32 %v634, 0.0
  %v741 = vmax.f32 %v639, 0.0
  %v742 = vmax.f32 %v642, 0.0
  %v743 = vmax.f32 %v647, 0.0
  %v744 = vmax.f32 %v650, 0.0
  %v745 = vmax.f32 %v655, 0.0
  %v746 = vmax.f32 %v658, 0.0
  %v747 = vmax.f32 %v663, 0.0
  %v748 = vmax.f32 %v666, 0.0
  %v749 = vmax.f32 %v671, 0.0
  %v750 = vmax.f32 %v674, 0.0
  %v751 = vmax.f32 %v679, 0.0
  %v752 = vmax.f32 %v682, 0.0
  %v753 = vmax.f32 %v687, 0.0
  %v754 = vmax.f32 %v690, 0.0
  %v755 = vmax.f32 %v695, 0.0
  %v756 = vmax.f32 %v698, 0.0
  %v757 = vmax.f32 %v703, 0.0
  %v758 = vmax.f32 %v706, 0.0
  %v759 = vmax.f32 %v711, 0.0
  %v760 = vmax.f32 %v714, 0.0
  %v761 = vmax.f32 %v719, 0.0
  %v762 = vmax.f32 %v722, 0.0
  %v763 = vmax.f32 %v727, 0.0
  %v764 = vmax.f32 %v730, 0.0
  %v765 = vpack.c.bf16 %v734, %v733
  %v766 = vpack.c.bf16 %v736, %v735
  %v767 = vpack.c.bf16 %v738, %v737
  %v768 = vpack.c.bf16 %v740, %v739
  %v769 = vpack.c.bf16 %v742, %v741
  %v770 = vpack.c.bf16 %v744, %v743
  %v771 = vpack.c.bf16 %v746, %v745
  %v772 = vpack.c.bf16 %v748, %v747
  %v773 = vpack.c.bf16 %v750, %v749
  %v774 = vpack.c.bf16 %v752, %v751
  %v775 = vpack.c.bf16 %v754, %v753
  %v776 = vpack.c.bf16 %v756, %v755
  %v777 = vpack.c.bf16 %v758, %v757
  %v778 = vpack.c.bf16 %v760, %v759
  %v779 = vpack.c.bf16 %v762, %v761
  %v780 = vpack.c.bf16 %v764, %v763
  %v781 = vld [vmem:[%s4] sm:$0xf]
  %v782 = vld [vmem:[%s4 + $0x4] sm:$0xf]
  %v783 = vld [vmem:[%s4 + $0x8] sm:$0xf]
  %v784 = vld [vmem:[%s4 + $0xc] sm:$0xf]
  %v789 = vunpack.c.l.b16 %v781
  %v790 = vunpack.c.l.b16 %v782
  %v791 = vunpack.c.l.b16 %v783
  %v792 = vunpack.c.l.b16 %v784
  %v793 = vpack.c.b16 %v790, %v789
  %v794 = vpack.c.b16 %v792, %v791
  %vm797 = vcmask 261120
  %v799 = vsel %vm797, %v765, 0
  %v802 = vsel %vm797, %v766, 0
  %v805 = vsel %vm797, %v767, 0
  %v808 = vsel %vm797, %v768, 0
  %v811 = vsel %vm797, %v769, 0
  %v814 = vsel %vm797, %v770, 0
  %v817 = vsel %vm797, %v771, 0
  %v820 = vsel %vm797, %v772, 0
  %v823 = vsel %vm797, %v773, 0
  %v826 = vsel %vm797, %v774, 0
  %v829 = vsel %vm797, %v775, 0
  %v832 = vsel %vm797, %v776, 0
  %v835 = vsel %vm797, %v777, 0
  %v838 = vsel %vm797, %v778, 0
  %v841 = vsel %vm797, %v779, 0
  %v844 = vsel %vm797, %v780, 0
  %846 = vmatprep.subr.bf16.mxu0 0
  %847 = vmatpush1.bf16.msra.mxu0 0
  %848 = vmatprep.subr.bf16.mxu0 0
  %849 = vmatpush1.bf16.msra.mxu0 0
  %850 = vmatprep.subr.bf16.mxu0 0
  %851 = vmatpush1.bf16.msra.mxu0 0
  %852 = vmatprep.subr.bf16.mxu0 0
  %853 = vmatpush1.bf16.msra.mxu0 0
  %854 = vmatprep.subr.bf16.mxu0 0
  %855 = vmatpush1.bf16.msra.mxu0 0
  %856 = vmatprep.subr.bf16.mxu0 0
  %857 = vmatpush1.bf16.msra.mxu0 0
  %858 = vmatprep.subr.bf16.mxu0 0
  %859 = vmatpush1.bf16.msra.mxu0 %v794
  %860 = vmatprep.subr.bf16.mxu0 0
  %861 = vmatpush1.bf16.msra.mxu0 %v793
  %862 = vmatprep.subr.bf16.mxu0 0
  %863 = vmatpush2.bf16.msra.mxu0 0
  %864 = vmatprep.subr.bf16.mxu0 0
  %865 = vmatpush2.bf16.msra.mxu0 0
  %866 = vmatprep.subr.bf16.mxu0 0
  %867 = vmatpush2.bf16.msra.mxu0 0
  %868 = vmatprep.subr.bf16.mxu0 0
  %869 = vmatpush2.bf16.msra.mxu0 0
  %870 = vmatprep.subr.bf16.mxu0 0
  %871 = vmatpush2.bf16.msra.mxu0 0
  %872 = vmatprep.subr.bf16.mxu0 0
  %873 = vmatpush2.bf16.msra.mxu0 0
  %874 = vmatprep.subr.bf16.mxu0 0
  %875 = vmatpush2.bf16.msra.mxu0 0
  %876 = vmatprep.subr.bf16.mxu0 0
  %877 = vmatpush2.bf16.msra.mxu0 0
  %878 = vmatprep.mubr.bf16.mxu0 0
  %879 = vmatmul.mubr.bf16.gmra.mxu0 %v799
  %v880 = vpop.f32.mrf.mxu0
  %v881 = vadd.f32 0.0, %v880
  %v882 = vpop.f32.mrf.mxu0
  %v883 = vpop.f32.mrf.mxu0
  %v884 = vadd.f32 0.0, %v883
  %v885 = vpop.f32.mrf.mxu0
  %886 = vmatprep.mubr.bf16.mxu0 0
  %887 = vmatmul.mubr.bf16.gmra.mxu0 %v802
  %v888 = vpop.f32.mrf.mxu0
  %v889 = vadd.f32 0.0, %v888
  %v890 = vpop.f32.mrf.mxu0
  %v891 = vpop.f32.mrf.mxu0
  %v892 = vadd.f32 0.0, %v891
  %v893 = vpop.f32.mrf.mxu0
  %894 = vmatprep.mubr.bf16.mxu0 0
  %895 = vmatmul.mubr.bf16.gmra.mxu0 %v805
  %v896 = vpop.f32.mrf.mxu0
  %v897 = vadd.f32 0.0, %v896
  %v898 = vpop.f32.mrf.mxu0
  %v899 = vpop.f32.mrf.mxu0
  %v900 = vadd.f32 0.0, %v899
  %v901 = vpop.f32.mrf.mxu0
  %902 = vmatprep.mubr.bf16.mxu0 0
  %903 = vmatmul.mubr.bf16.gmra.mxu0 %v808
  %v904 = vpop.f32.mrf.mxu0
  %v905 = vadd.f32 0.0, %v904
  %v906 = vpop.f32.mrf.mxu0
  %v907 = vpop.f32.mrf.mxu0
  %v908 = vadd.f32 0.0, %v907
  %v909 = vpop.f32.mrf.mxu0
  %910 = vmatprep.mubr.bf16.mxu0 0
  %911 = vmatmul.mubr.bf16.gmra.mxu0 %v811
  %v912 = vpop.f32.mrf.mxu0
  %v913 = vadd.f32 0.0, %v912
  %v914 = vpop.f32.mrf.mxu0
  %v915 = vpop.f32.mrf.mxu0
  %v916 = vadd.f32 0.0, %v915
  %v917 = vpop.f32.mrf.mxu0
  %918 = vmatprep.mubr.bf16.mxu0 0
  %919 = vmatmul.mubr.bf16.gmra.mxu0 %v814
  %v920 = vpop.f32.mrf.mxu0
  %v921 = vadd.f32 0.0, %v920
  %v922 = vpop.f32.mrf.mxu0
  %v923 = vpop.f32.mrf.mxu0
  %v924 = vadd.f32 0.0, %v923
  %v925 = vpop.f32.mrf.mxu0
  %926 = vmatprep.mubr.bf16.mxu0 0
  %927 = vmatmul.mubr.bf16.gmra.mxu0 %v817
  %v928 = vpop.f32.mrf.mxu0
  %v929 = vadd.f32 0.0, %v928
  %v930 = vpop.f32.mrf.mxu0
  %v931 = vpop.f32.mrf.mxu0
  %v932 = vadd.f32 0.0, %v931
  %v933 = vpop.f32.mrf.mxu0
  %934 = vmatprep.mubr.bf16.mxu0 0
  %935 = vmatmul.mubr.bf16.gmra.mxu0 %v820
  %v936 = vpop.f32.mrf.mxu0
  %v937 = vadd.f32 0.0, %v936
  %v938 = vpop.f32.mrf.mxu0
  %v939 = vpop.f32.mrf.mxu0
  %v940 = vadd.f32 0.0, %v939
  %v941 = vpop.f32.mrf.mxu0
  %942 = vmatprep.mubr.bf16.mxu0 0
  %943 = vmatmul.mubr.bf16.gmra.mxu0 %v823
  %v944 = vpop.f32.mrf.mxu0
  %v945 = vadd.f32 0.0, %v944
  %v946 = vpop.f32.mrf.mxu0
  %v947 = vpop.f32.mrf.mxu0
  %v948 = vadd.f32 0.0, %v947
  %v949 = vpop.f32.mrf.mxu0
  %950 = vmatprep.mubr.bf16.mxu0 0
  %951 = vmatmul.mubr.bf16.gmra.mxu0 %v826
  %v952 = vpop.f32.mrf.mxu0
  %v953 = vadd.f32 0.0, %v952
  %v954 = vpop.f32.mrf.mxu0
  %v955 = vpop.f32.mrf.mxu0
  %v956 = vadd.f32 0.0, %v955
  %v957 = vpop.f32.mrf.mxu0
  %958 = vmatprep.mubr.bf16.mxu0 0
  %959 = vmatmul.mubr.bf16.gmra.mxu0 %v829
  %v960 = vpop.f32.mrf.mxu0
  %v961 = vadd.f32 0.0, %v960
  %v962 = vpop.f32.mrf.mxu0
  %v963 = vpop.f32.mrf.mxu0
  %v964 = vadd.f32 0.0, %v963
  %v965 = vpop.f32.mrf.mxu0
  %966 = vmatprep.mubr.bf16.mxu0 0
  %967 = vmatmul.mubr.bf16.gmra.mxu0 %v832
  %v968 = vpop.f32.mrf.mxu0
  %v969 = vadd.f32 0.0, %v968
  %v970 = vpop.f32.mrf.mxu0
  %v971 = vpop.f32.mrf.mxu0
  %v972 = vadd.f32 0.0, %v971
  %v973 = vpop.f32.mrf.mxu0
  %974 = vmatprep.mubr.bf16.mxu0 0
  %975 = vmatmul.mubr.bf16.gmra.mxu0 %v835
  %v976 = vpop.f32.mrf.mxu0
  %v977 = vadd.f32 0.0, %v976
  %v978 = vpop.f32.mrf.mxu0
  %v979 = vpop.f32.mrf.mxu0
  %v980 = vadd.f32 0.0, %v979
  %v981 = vpop.f32.mrf.mxu0
  %982 = vmatprep.mubr.bf16.mxu0 0
  %983 = vmatmul.mubr.bf16.gmra.mxu0 %v838
  %v984 = vpop.f32.mrf.mxu0
  %v985 = vadd.f32 0.0, %v984
  %v986 = vpop.f32.mrf.mxu0
  %v987 = vpop.f32.mrf.mxu0
  %v988 = vadd.f32 0.0, %v987
  %v989 = vpop.f32.mrf.mxu0
  %990 = vmatprep.mubr.bf16.mxu0 0
  %991 = vmatmul.mubr.bf16.gmra.mxu0 %v841
  %v992 = vpop.f32.mrf.mxu0
  %v993 = vadd.f32 0.0, %v992
  %v994 = vpop.f32.mrf.mxu0
  %v995 = vpop.f32.mrf.mxu0
  %v996 = vadd.f32 0.0, %v995
  %v997 = vpop.f32.mrf.mxu0
  %998 = vmatprep.mubr.bf16.mxu0 0
  %999 = vmatmul.mubr.bf16.gmra.mxu0 %v844
  %v1000 = vpop.f32.mrf.mxu0
  %v1001 = vadd.f32 0.0, %v1000
  %v1002 = vpop.f32.mrf.mxu0
  %v1003 = vpop.f32.mrf.mxu0
  %v1004 = vadd.f32 0.0, %v1003
  %v1005 = vpop.f32.mrf.mxu0
  %1006 = vdwg.mxu0
  %v1007 = vpack.c.bf16 %v884, %v881
  %v1008 = vpack.c.bf16 %v892, %v889
  %v1009 = vpack.c.bf16 %v900, %v897
  %v1010 = vpack.c.bf16 %v908, %v905
  %v1011 = vpack.c.bf16 %v916, %v913
  %v1012 = vpack.c.bf16 %v924, %v921
  %v1013 = vpack.c.bf16 %v932, %v929
  %v1014 = vpack.c.bf16 %v940, %v937
  %v1015 = vpack.c.bf16 %v948, %v945
  %v1016 = vpack.c.bf16 %v956, %v953
  %v1017 = vpack.c.bf16 %v964, %v961
  %v1018 = vpack.c.bf16 %v972, %v969
  %v1019 = vpack.c.bf16 %v980, %v977
  %v1020 = vpack.c.bf16 %v988, %v985
  %v1021 = vpack.c.bf16 %v996, %v993
  %v1022 = vpack.c.bf16 %v1004, %v1001
  %v1023 = vld [vmem:[%s5] sm:$0x1]
  %v1025 = vlaneseq
  %v1026 = vshrl.u32 %v1025, 7
  %v1027 = vsub.s32 0, %v1026
  %v1028 = vrot.slane %v1023, %v1027
  %1030 = vmatprep.subr.bf16.mxu0 0
  %1031 = vmatpush1.bf16.msra.mxu0 %v1014
  %1032 = vmatprep.subr.bf16.mxu0 0
  %1033 = vmatpush1.bf16.msra.mxu0 %v1013
  %1034 = vmatprep.subr.bf16.mxu0 0
  %1035 = vmatpush1.bf16.msra.mxu0 %v1012
  %1036 = vmatprep.subr.bf16.mxu0 0
  %1037 = vmatpush1.bf16.msra.mxu0 %v1011
  %1038 = vmatprep.subr.bf16.mxu0 0
  %1039 = vmatpush1.bf16.msra.mxu0 %v1010
  %1040 = vmatprep.subr.bf16.mxu0 0
  %1041 = vmatpush1.bf16.msra.mxu0 %v1009
  %1042 = vmatprep.subr.bf16.mxu0 0
  %1043 = vmatpush1.bf16.msra.mxu0 %v1008
  %1044 = vmatprep.subr.bf16.mxu0 0
  %1045 = vmatpush1.bf16.msra.mxu0 %v1007
  %1046 = vmatprep.subr.bf16.mxu0 0
  %1047 = vmatpush2.bf16.msra.mxu0 %v1022
  %1048 = vmatprep.subr.bf16.mxu0 0
  %1049 = vmatpush2.bf16.msra.mxu0 %v1021
  %1050 = vmatprep.subr.bf16.mxu0 0
  %1051 = vmatpush2.bf16.msra.mxu0 %v1020
  %1052 = vmatprep.subr.bf16.mxu0 0
  %1053 = vmatpush2.bf16.msra.mxu0 %v1019
  %1054 = vmatprep.subr.bf16.mxu0 0
  %1055 = vmatpush2.bf16.msra.mxu0 %v1018
  %1056 = vmatprep.subr.bf16.mxu0 0
  %1057 = vmatpush2.bf16.msra.mxu0 %v1017
  %1058 = vmatprep.subr.bf16.mxu0 0
  %1059 = vmatpush2.bf16.msra.mxu0 %v1016
  %1060 = vmatprep.subr.bf16.mxu0 0
  %1061 = vmatpush2.bf16.msra.mxu0 %v1015
  %1062 = vmatprep.mubr.bf16.mxu0 %v509
  %1063 = vmatmul.mubr.bf16.gmra.mxu0 %v508
  %v1064 = vpop.f32.mrf.mxu0
  %v1065 = vadd.f32 %v1028, %v1064
  %v1066 = vpop.f32.mrf.mxu0
  %v1067 = vpop.f32.mrf.mxu0
  %v1068 = vadd.f32 %v1028, %v1067
  %v1069 = vpop.f32.mrf.mxu0
  %1070 = vmatprep.mubr.bf16.mxu0 %v511
  %1071 = vmatmul.mubr.bf16.gmra.mxu0 %v510
  %v1072 = vpop.f32.mrf.mxu0
  %v1073 = vadd.f32 %v1028, %v1072
  %v1074 = vpop.f32.mrf.mxu0
  %v1075 = vpop.f32.mrf.mxu0
  %v1076 = vadd.f32 %v1028, %v1075
  %v1077 = vpop.f32.mrf.mxu0
  %1078 = vmatprep.mubr.bf16.mxu0 %v513
  %1079 = vmatmul.mubr.bf16.gmra.mxu0 %v512
  %v1080 = vpop.f32.mrf.mxu0
  %v1081 = vadd.f32 %v1028, %v1080
  %v1082 = vpop.f32.mrf.mxu0
  %v1083 = vpop.f32.mrf.mxu0
  %v1084 = vadd.f32 %v1028, %v1083
  %v1085 = vpop.f32.mrf.mxu0
  %1086 = vmatprep.mubr.bf16.mxu0 %v515
  %1087 = vmatmul.mubr.bf16.gmra.mxu0 %v514
  %v1088 = vpop.f32.mrf.mxu0
  %v1089 = vadd.f32 %v1028, %v1088
  %v1090 = vpop.f32.mrf.mxu0
  %v1091 = vpop.f32.mrf.mxu0
  %v1092 = vadd.f32 %v1028, %v1091
  %v1093 = vpop.f32.mrf.mxu0
  %1094 = vmatprep.mubr.bf16.mxu0 %v517
  %1095 = vmatmul.mubr.bf16.gmra.mxu0 %v516
  %v1096 = vpop.f32.mrf.mxu0
  %v1097 = vadd.f32 %v1028, %v1096
  %v1098 = vpop.f32.mrf.mxu0
  %v1099 = vpop.f32.mrf.mxu0
  %v1100 = vadd.f32 %v1028, %v1099
  %v1101 = vpop.f32.mrf.mxu0
  %1102 = vmatprep.mubr.bf16.mxu0 %v519
  %1103 = vmatmul.mubr.bf16.gmra.mxu0 %v518
  %v1104 = vpop.f32.mrf.mxu0
  %v1105 = vadd.f32 %v1028, %v1104
  %v1106 = vpop.f32.mrf.mxu0
  %v1107 = vpop.f32.mrf.mxu0
  %v1108 = vadd.f32 %v1028, %v1107
  %v1109 = vpop.f32.mrf.mxu0
  %1110 = vmatprep.mubr.bf16.mxu0 %v521
  %1111 = vmatmul.mubr.bf16.gmra.mxu0 %v520
  %v1112 = vpop.f32.mrf.mxu0
  %v1113 = vadd.f32 %v1028, %v1112
  %v1114 = vpop.f32.mrf.mxu0
  %v1115 = vpop.f32.mrf.mxu0
  %v1116 = vadd.f32 %v1028, %v1115
  %v1117 = vpop.f32.mrf.mxu0
  %1118 = vmatprep.mubr.bf16.mxu0 %v523
  %1119 = vmatmul.mubr.bf16.gmra.mxu0 %v522
  %v1120 = vpop.f32.mrf.mxu0
  %v1121 = vadd.f32 %v1028, %v1120
  %v1122 = vpop.f32.mrf.mxu0
  %v1123 = vpop.f32.mrf.mxu0
  %v1124 = vadd.f32 %v1028, %v1123
  %v1125 = vpop.f32.mrf.mxu0
  %1126 = vmatprep.mubr.bf16.mxu0 %v525
  %1127 = vmatmul.mubr.bf16.gmra.mxu0 %v524
  %v1128 = vpop.f32.mrf.mxu0
  %v1129 = vadd.f32 %v1028, %v1128
  %v1130 = vpop.f32.mrf.mxu0
  %v1131 = vpop.f32.mrf.mxu0
  %v1132 = vadd.f32 %v1028, %v1131
  %v1133 = vpop.f32.mrf.mxu0
  %1134 = vmatprep.mubr.bf16.mxu0 %v527
  %1135 = vmatmul.mubr.bf16.gmra.mxu0 %v526
  %v1136 = vpop.f32.mrf.mxu0
  %v1137 = vadd.f32 %v1028, %v1136
  %v1138 = vpop.f32.mrf.mxu0
  %v1139 = vpop.f32.mrf.mxu0
  %v1140 = vadd.f32 %v1028, %v1139
  %v1141 = vpop.f32.mrf.mxu0
  %1142 = vmatprep.mubr.bf16.mxu0 %v529
  %1143 = vmatmul.mubr.bf16.gmra.mxu0 %v528
  %v1144 = vpop.f32.mrf.mxu0
  %v1145 = vadd.f32 %v1028, %v1144
  %v1146 = vpop.f32.mrf.mxu0
  %v1147 = vpop.f32.mrf.mxu0
  %v1148 = vadd.f32 %v1028, %v1147
  %v1149 = vpop.f32.mrf.mxu0
  %1150 = vmatprep.mubr.bf16.mxu0 %v531
  %1151 = vmatmul.mubr.bf16.gmra.mxu0 %v530
  %v1152 = vpop.f32.mrf.mxu0
  %v1153 = vadd.f32 %v1028, %v1152
  %v1154 = vpop.f32.mrf.mxu0
  %v1155 = vpop.f32.mrf.mxu0
  %v1156 = vadd.f32 %v1028, %v1155
  %v1157 = vpop.f32.mrf.mxu0
  %1158 = vmatprep.mubr.bf16.mxu0 %v533
  %1159 = vmatmul.mubr.bf16.gmra.mxu0 %v532
  %v1160 = vpop.f32.mrf.mxu0
  %v1161 = vadd.f32 %v1028, %v1160
  %v1162 = vpop.f32.mrf.mxu0
  %v1163 = vpop.f32.mrf.mxu0
  %v1164 = vadd.f32 %v1028, %v1163
  %v1165 = vpop.f32.mrf.mxu0
  %1166 = vmatprep.mubr.bf16.mxu0 %v535
  %1167 = vmatmul.mubr.bf16.gmra.mxu0 %v534
  %v1168 = vpop.f32.mrf.mxu0
  %v1169 = vadd.f32 %v1028, %v1168
  %v1170 = vpop.f32.mrf.mxu0
  %v1171 = vpop.f32.mrf.mxu0
  %v1172 = vadd.f32 %v1028, %v1171
  %v1173 = vpop.f32.mrf.mxu0
  %1174 = vmatprep.mubr.bf16.mxu0 %v537
  %1175 = vmatmul.mubr.bf16.gmra.mxu0 %v536
  %v1176 = vpop.f32.mrf.mxu0
  %v1177 = vadd.f32 %v1028, %v1176
  %v1178 = vpop.f32.mrf.mxu0
  %v1179 = vpop.f32.mrf.mxu0
  %v1180 = vadd.f32 %v1028, %v1179
  %v1181 = vpop.f32.mrf.mxu0
  %1182 = vmatprep.mubr.bf16.mxu0 %v539
  %1183 = vmatmul.mubr.bf16.gmra.mxu0 %v538
  %v1184 = vpop.f32.mrf.mxu0
  %v1185 = vadd.f32 %v1028, %v1184
  %v1186 = vpop.f32.mrf.mxu0
  %v1187 = vpop.f32.mrf.mxu0
  %v1188 = vadd.f32 %v1028, %v1187
  %v1189 = vpop.f32.mrf.mxu0
  %1190 = vdwg.mxu0
  %v1191 = vmax.f32 %v1065, 0.0
  %v1192 = vmax.f32 %v1068, 0.0
  %v1193 = vmax.f32 %v1073, 0.0
  %v1194 = vmax.f32 %v1076, 0.0
  %v1195 = vmax.f32 %v1081, 0.0
  %v1196 = vmax.f32 %v1084, 0.0
  %v1197 = vmax.f32 %v1089, 0.0
  %v1198 = vmax.f32 %v1092, 0.0
  %v1199 = vmax.f32 %v1097, 0.0
  %v1200 = vmax.f32 %v1100, 0.0
  %v1201 = vmax.f32 %v1105, 0.0
  %v1202 = vmax.f32 %v1108, 0.0
  %v1203 = vmax.f32 %v1113, 0.0
  %v1204 = vmax.f32 %v1116, 0.0
  %v1205 = vmax.f32 %v1121, 0.0
  %v1206 = vmax.f32 %v1124, 0.0
  %v1207 = vmax.f32 %v1129, 0.0
  %v1208 = vmax.f32 %v1132, 0.0
  %v1209 = vmax.f32 %v1137, 0.0
  %v1210 = vmax.f32 %v1140, 0.0
  %v1211 = vmax.f32 %v1145, 0.0
  %v1212 = vmax.f32 %v1148, 0.0
  %v1213 = vmax.f32 %v1153, 0.0
  %v1214 = vmax.f32 %v1156, 0.0
  %v1215 = vmax.f32 %v1161, 0.0
  %v1216 = vmax.f32 %v1164, 0.0
  %v1217 = vmax.f32 %v1169, 0.0
  %v1218 = vmax.f32 %v1172, 0.0
  %v1219 = vmax.f32 %v1177, 0.0
  %v1220 = vmax.f32 %v1180, 0.0
  %v1221 = vmax.f32 %v1185, 0.0
  %v1222 = vmax.f32 %v1188, 0.0
  %v1223 = vsel %vm797, %v1191, -inf
  %v1224 = vsel %vm797, %v1192, -inf
  %v1225 = vmax.f32 %v1223, %v1224
  %v1226 = vrot.slane %v1225, 4
  %v1227 = vmax.f32 %v1225, %v1226
  %v1228 = vrot.slane %v1227, 2
  %v1229 = vmax.f32 %v1227, %v1228
  %v1230 = vrot.slane %v1229, 1
  %v1231 = vmax.f32 %v1229, %v1230
  %v1232 = vsel %vm797, %v1193, -inf
  %v1233 = vsel %vm797, %v1194, -inf
  %v1234 = vmax.f32 %v1232, %v1233
  %v1235 = vrot.slane %v1234, 4
  %v1236 = vmax.f32 %v1234, %v1235
  %v1237 = vrot.slane %v1236, 2
  %v1238 = vmax.f32 %v1236, %v1237
  %v1239 = vrot.slane %v1238, 1
  %v1240 = vmax.f32 %v1238, %v1239
  %v1241 = vsel %vm797, %v1195, -inf
  %v1242 = vsel %vm797, %v1196, -inf
  %v1243 = vmax.f32 %v1241, %v1242
  %v1244 = vrot.slane %v1243, 4
  %v1245 = vmax.f32 %v1243, %v1244
  %v1246 = vrot.slane %v1245, 2
  %v1247 = vmax.f32 %v1245, %v1246
  %v1248 = vrot.slane %v1247, 1
  %v1249 = vmax.f32 %v1247, %v1248
  %v1250 = vsel %vm797, %v1197, -inf
  %v1251 = vsel %vm797, %v1198, -inf
  %v1252 = vmax.f32 %v1250, %v1251
  %v1253 = vrot.slane %v1252, 4
  %v1254 = vmax.f32 %v1252, %v1253
  %v1255 = vrot.slane %v1254, 2
  %v1256 = vmax.f32 %v1254, %v1255
  %v1257 = vrot.slane %v1256, 1
  %v1258 = vmax.f32 %v1256, %v1257
  %v1259 = vsel %vm797, %v1199, -inf
  %v1260 = vsel %vm797, %v1200, -inf
  %v1261 = vmax.f32 %v1259, %v1260
  %v1262 = vrot.slane %v1261, 4
  %v1263 = vmax.f32 %v1261, %v1262
  %v1264 = vrot.slane %v1263, 2
  %v1265 = vmax.f32 %v1263, %v1264
  %v1266 = vrot.slane %v1265, 1
  %v1267 = vmax.f32 %v1265, %v1266
  %v1268 = vsel %vm797, %v1201, -inf
  %v1269 = vsel %vm797, %v1202, -inf
  %v1270 = vmax.f32 %v1268, %v1269
  %v1271 = vrot.slane %v1270, 4
  %v1272 = vmax.f32 %v1270, %v1271
  %v1273 = vrot.slane %v1272, 2
  %v1274 = vmax.f32 %v1272, %v1273
  %v1275 = vrot.slane %v1274, 1
  %v1276 = vmax.f32 %v1274, %v1275
  %v1277 = vsel %vm797, %v1203, -inf
  %v1278 = vsel %vm797, %v1204, -inf
  %v1279 = vmax.f32 %v1277, %v1278
  %v1280 = vrot.slane %v1279, 4
  %v1281 = vmax.f32 %v1279, %v1280
  %v1282 = vrot.slane %v1281, 2
  %v1283 = vmax.f32 %v1281, %v1282
  %v1284 = vrot.slane %v1283, 1
  %v1285 = vmax.f32 %v1283, %v1284
  %v1286 = vsel %vm797, %v1205, -inf
  %v1287 = vsel %vm797, %v1206, -inf
  %v1288 = vmax.f32 %v1286, %v1287
  %v1289 = vrot.slane %v1288, 4
  %v1290 = vmax.f32 %v1288, %v1289
  %v1291 = vrot.slane %v1290, 2
  %v1292 = vmax.f32 %v1290, %v1291
  %v1293 = vrot.slane %v1292, 1
  %v1294 = vmax.f32 %v1292, %v1293
  %v1295 = vsel %vm797, %v1207, -inf
  %v1296 = vsel %vm797, %v1208, -inf
  %v1297 = vmax.f32 %v1295, %v1296
  %v1298 = vrot.slane %v1297, 4
  %v1299 = vmax.f32 %v1297, %v1298
  %v1300 = vrot.slane %v1299, 2
  %v1301 = vmax.f32 %v1299, %v1300
  %v1302 = vrot.slane %v1301, 1
  %v1303 = vmax.f32 %v1301, %v1302
  %v1304 = vsel %vm797, %v1209, -inf
  %v1305 = vsel %vm797, %v1210, -inf
  %v1306 = vmax.f32 %v1304, %v1305
  %v1307 = vrot.slane %v1306, 4
  %v1308 = vmax.f32 %v1306, %v1307
  %v1309 = vrot.slane %v1308, 2
  %v1310 = vmax.f32 %v1308, %v1309
  %v1311 = vrot.slane %v1310, 1
  %v1312 = vmax.f32 %v1310, %v1311
  %v1313 = vsel %vm797, %v1211, -inf
  %v1314 = vsel %vm797, %v1212, -inf
  %v1315 = vmax.f32 %v1313, %v1314
  %v1316 = vrot.slane %v1315, 4
  %v1317 = vmax.f32 %v1315, %v1316
  %v1318 = vrot.slane %v1317, 2
  %v1319 = vmax.f32 %v1317, %v1318
  %v1320 = vrot.slane %v1319, 1
  %v1321 = vmax.f32 %v1319, %v1320
  %v1322 = vsel %vm797, %v1213, -inf
  %v1323 = vsel %vm797, %v1214, -inf
  %v1324 = vmax.f32 %v1322, %v1323
  %v1325 = vrot.slane %v1324, 4
  %v1326 = vmax.f32 %v1324, %v1325
  %v1327 = vrot.slane %v1326, 2
  %v1328 = vmax.f32 %v1326, %v1327
  %v1329 = vrot.slane %v1328, 1
  %v1330 = vmax.f32 %v1328, %v1329
  %v1331 = vsel %vm797, %v1215, -inf
  %v1332 = vsel %vm797, %v1216, -inf
  %v1333 = vmax.f32 %v1331, %v1332
  %v1334 = vrot.slane %v1333, 4
  %v1335 = vmax.f32 %v1333, %v1334
  %v1336 = vrot.slane %v1335, 2
  %v1337 = vmax.f32 %v1335, %v1336
  %v1338 = vrot.slane %v1337, 1
  %v1339 = vmax.f32 %v1337, %v1338
  %v1340 = vsel %vm797, %v1217, -inf
  %v1341 = vsel %vm797, %v1218, -inf
  %v1342 = vmax.f32 %v1340, %v1341
  %v1343 = vrot.slane %v1342, 4
  %v1344 = vmax.f32 %v1342, %v1343
  %v1345 = vrot.slane %v1344, 2
  %v1346 = vmax.f32 %v1344, %v1345
  %v1347 = vrot.slane %v1346, 1
  %v1348 = vmax.f32 %v1346, %v1347
  %v1349 = vsel %vm797, %v1219, -inf
  %v1350 = vsel %vm797, %v1220, -inf
  %v1351 = vmax.f32 %v1349, %v1350
  %v1352 = vrot.slane %v1351, 4
  %v1353 = vmax.f32 %v1351, %v1352
  %v1354 = vrot.slane %v1353, 2
  %v1355 = vmax.f32 %v1353, %v1354
  %v1356 = vrot.slane %v1355, 1
  %v1357 = vmax.f32 %v1355, %v1356
  %v1358 = vsel %vm797, %v1221, -inf
  %v1359 = vsel %vm797, %v1222, -inf
  %v1360 = vmax.f32 %v1358, %v1359
  %v1361 = vrot.slane %v1360, 4
  %v1362 = vmax.f32 %v1360, %v1361
  %v1363 = vrot.slane %v1362, 2
  %v1364 = vmax.f32 %v1362, %v1363
  %v1365 = vrot.slane %v1364, 1
  %v1366 = vmax.f32 %v1364, %v1365
  %v1367 = vpack.c.bf16 %v1231, %v1231
  %v1368 = vpack.c.bf16 %v1240, %v1240
  %v1369 = vpack.c.bf16 %v1249, %v1249
  %v1370 = vpack.c.bf16 %v1258, %v1258
  %v1371 = vpack.c.bf16 %v1267, %v1267
  %v1372 = vpack.c.bf16 %v1276, %v1276
  %v1373 = vpack.c.bf16 %v1285, %v1285
  %v1374 = vpack.c.bf16 %v1294, %v1294
  %v1375 = vpack.c.bf16 %v1303, %v1303
  %v1376 = vpack.c.bf16 %v1312, %v1312
  %v1377 = vpack.c.bf16 %v1321, %v1321
  %v1378 = vpack.c.bf16 %v1330, %v1330
  %v1379 = vpack.c.bf16 %v1339, %v1339
  %v1380 = vpack.c.bf16 %v1348, %v1348
  %v1381 = vpack.c.bf16 %v1357, %v1357
  %v1382 = vpack.c.bf16 %v1366, %v1366
  %v1383 = vld [vmem:[%s6] sm:$0xf]
  %v1384 = vld [vmem:[%s6 + $0x4] sm:$0xf]
  %v1385 = vld [vmem:[%s6 + $0x8] sm:$0xf]
  %v1386 = vld [vmem:[%s6 + $0xc] sm:$0xf]
  %v1387 = vld [vmem:[%s7] sm:$0x1]
  %v1389 = vlaneseq
  %v1390 = vshrl.u32 %v1389, 7
  %v1391 = vsub.s32 0, %v1390
  %v1392 = vrot.slane %v1387, %v1391
  %v1410 = vunpack.c.l.b16 %v1367
  %v1411 = vunpack.c.l.b16 %v1368
  %v1412 = vunpack.c.l.b16 %v1369
  %v1413 = vunpack.c.l.b16 %v1370
  %v1414 = vunpack.c.l.b16 %v1371
  %v1415 = vunpack.c.l.b16 %v1372
  %v1416 = vunpack.c.l.b16 %v1373
  %v1417 = vunpack.c.l.b16 %v1374
  %v1418 = vunpack.c.l.b16 %v1375
  %v1419 = vunpack.c.l.b16 %v1376
  %v1420 = vunpack.c.l.b16 %v1377
  %v1421 = vunpack.c.l.b16 %v1378
  %v1422 = vunpack.c.l.b16 %v1379
  %v1423 = vunpack.c.l.b16 %v1380
  %v1424 = vunpack.c.l.b16 %v1381
  %v1425 = vunpack.c.l.b16 %v1382
  %vm1426 = vcmask 1041409
  %v1427 = vsel %vm1426, %v1411, %v1410
  %vm1428 = vcmask 1042434
  %v1429 = vsel %vm1428, %v1412, %v1427
  %vm1430 = vcmask 1043459
  %v1431 = vsel %vm1430, %v1413, %v1429
  %vm1432 = vcmask 1044484
  %v1433 = vsel %vm1432, %v1414, %v1431
  %vm1434 = vcmask 1045509
  %v1435 = vsel %vm1434, %v1415, %v1433
  %vm1436 = vcmask 1046534
  %v1437 = vsel %vm1436, %v1416, %v1435
  %vm1438 = vcmask 1047559
  %v1439 = vsel %vm1438, %v1417, %v1437
  %v1440 = vsel %vm1426, %v1419, %v1418
  %v1441 = vsel %vm1428, %v1420, %v1440
  %v1442 = vsel %vm1430, %v1421, %v1441
  %v1443 = vsel %vm1432, %v1422, %v1442
  %v1444 = vsel %vm1434, %v1423, %v1443
  %v1445 = vsel %vm1436, %v1424, %v1444
  %v1446 = vsel %vm1438, %v1425, %v1445
  %v1447 = vpack.c.b16 %v1446, %v1439
  %v1452 = vunpack.c.l.b16 %v1383
  %v1453 = vunpack.c.l.b16 %v1384
  %v1454 = vunpack.c.l.b16 %v1385
  %v1455 = vunpack.c.l.b16 %v1386
  %v1456 = vpack.c.b16 %v1453, %v1452
  %v1457 = vpack.c.b16 %v1455, %v1454
  %v1461 = vsel %vm797, %v1447, 0
  %1463 = vmatprep.subr.bf16.mxu0 0
  %1464 = vmatpush1.bf16.msra.mxu0 0
  %1465 = vmatprep.subr.bf16.mxu0 0
  %1466 = vmatpush1.bf16.msra.mxu0 0
  %1467 = vmatprep.subr.bf16.mxu0 0
  %1468 = vmatpush1.bf16.msra.mxu0 0
  %1469 = vmatprep.subr.bf16.mxu0 0
  %1470 = vmatpush1.bf16.msra.mxu0 0
  %1471 = vmatprep.subr.bf16.mxu0 0
  %1472 = vmatpush1.bf16.msra.mxu0 0
  %1473 = vmatprep.subr.bf16.mxu0 0
  %1474 = vmatpush1.bf16.msra.mxu0 0
  %1475 = vmatprep.subr.bf16.mxu0 0
  %1476 = vmatpush1.bf16.msra.mxu0 %v1457
  %1477 = vmatprep.subr.bf16.mxu0 0
  %1478 = vmatpush1.bf16.msra.mxu0 %v1456
  %1479 = vmatprep.subr.bf16.mxu0 0
  %1480 = vmatpush2.bf16.msra.mxu0 0
  %1481 = vmatprep.subr.bf16.mxu0 0
  %1482 = vmatpush2.bf16.msra.mxu0 0
  %1483 = vmatprep.subr.bf16.mxu0 0
  %1484 = vmatpush2.bf16.msra.mxu0 0
  %1485 = vmatprep.subr.bf16.mxu0 0
  %1486 = vmatpush2.bf16.msra.mxu0 0
  %1487 = vmatprep.subr.bf16.mxu0 0
  %1488 = vmatpush2.bf16.msra.mxu0 0
  %1489 = vmatprep.subr.bf16.mxu0 0
  %1490 = vmatpush2.bf16.msra.mxu0 0
  %1491 = vmatprep.subr.bf16.mxu0 0
  %1492 = vmatpush2.bf16.msra.mxu0 0
  %1493 = vmatprep.subr.bf16.mxu0 0
  %1494 = vmatpush2.bf16.msra.mxu0 0
  %1495 = vmatprep.mubr.bf16.mxu0 0
  %1496 = vmatmul.mubr.bf16.gmra.mxu0 %v1461
  %v1497 = vpop.f32.mrf.mxu0
  %v1498 = vadd.f32 %v1392, %v1497
  %v1499 = vpop.f32.mrf.mxu0
  %v1500 = vpop.f32.mrf.mxu0
  %v1501 = vadd.f32 %v1392, %v1500
  %v1502 = vpop.f32.mrf.mxu0
  %1503 = vdwg.mxu0
  %1504 = vst [vmem:[%s8] sm:$0xff] %v1498
  %1505 = vst [vmem:[%s8 + $0x8] sm:$0xff] %v1501
  // Predicated region
  $region34: #{classifier_forward.1} parent=0 // pred_check
    _
  $region35: #{classifier_forward.1} parent=0 // pred_check_branch
    %1507 = sbr.rel (0) target = $region37
  $region36: #{classifier_forward.1} parent=0 // pred_region
    _
  $region37: #{classifier_forward.1} parent=0 // pred_fallthru
    _
  // Predicated region
  $region38: #{classifier_forward.1} parent=0 // pred_check
    _
  $region39: #{classifier_forward.1} parent=0 // pred_check_branch
    %1509 = sbr.rel (0) target = $region41
  $region40: #{classifier_forward.1} parent=0 // pred_region
    _
  $region41: #{classifier_forward.1} parent=0 // pred_fallthru
    _

</llo_original>
